<compile_context>
chip_gen: v5e
topology: v5e:2x2
jax: 0.10.0
libtpu: 0.0.40
codegen_flags: <defaults>
</compile_context>

<pallas_src>
import jax
import jax.numpy as jnp
from jax.experimental import pallas as pl
from jax.experimental.pallas import tpu as pltpu


def _round_up(n, m):
    return ((n + m - 1) // m) * m


def _cdiv(a, b):
    return (a + b - 1) // b


def _vmem_capacity_bytes():
    try:
        return int(pltpu.get_tpu_info().vmem_capacity_bytes)
    except Exception:
        return 64 * 1024 * 1024  # conservative (v7x-sized) fallback


def _layernorm_write(r, x_unused, g_ref, beta_ref, o_ref, d_real, d_pad):
    """Masked LayerNorm over the real dim_model lanes (torch eps = 1e-5)."""
    inv_d = 1.0 / float(d_real)
    mean = jnp.sum(r, axis=-1, keepdims=True) * inv_d
    diff = r - mean
    if d_pad != d_real:
        col = jax.lax.broadcasted_iota(jnp.int32, (1, d_pad), 1)
        diff = diff * (col < d_real).astype(jnp.float32)
    var = jnp.sum(diff * diff, axis=-1, keepdims=True) * inv_d
    inv = jax.lax.rsqrt(var + 1e-5)
    g_inv = inv * g_ref[...]                      # fold gamma into 1/std
    o_ref[...] = (diff * g_inv + beta_ref[...]).astype(o_ref.dtype)


def _make_resident_kernel(d_real, d_pad):
    """Both weight matrices resident in VMEM; 1-D row grid."""
    def kernel(x_ref, w1_ref, b1_ref, w2_ref, b2_ref, g_ref, beta_ref, o_ref, h_ref):
        x = x_ref[...]                                           # (tm, Dp) f32
        # fc1 + ReLU (MXU matmul in weight dtype, f32 accumulate)
        h = jnp.dot(x.astype(w1_ref.dtype), w1_ref[...],
                    preferred_element_type=jnp.float32)
        h = jnp.maximum(h + b1_ref[...], 0.0)
        # Stage the (tm, Hp) activation in weight dtype -> half the scratch traffic.
        h_ref[...] = h.astype(h_ref.dtype)
        # fc2
        y = jnp.dot(h_ref[...], w2_ref[...], preferred_element_type=jnp.float32)
        # dropout(p=0) = identity; residual (padded lanes are zero-fed)
        r = y + b2_ref[...] + x
        _layernorm_write(r, x, g_ref, beta_ref, o_ref, d_real, d_pad)

    return kernel


def _make_streamed_kernel(d_real, d_pad):
    """Hidden dim streamed in tk chunks (grid = (rows, Hp//tk), k last / arbitrary)."""
    def kernel(x_ref, w1_ref, b1_ref, w2_ref, b2_ref, g_ref, beta_ref, o_ref, acc_ref):
        k = pl.program_id(1)

        @pl.when(k == 0)
        def _():
            acc_ref[...] = jnp.zeros_like(acc_ref)

        x = x_ref[...]                                           # (tm, Dp) f32
        h = jnp.dot(x.astype(w1_ref.dtype), w1_ref[...],         # (tm, tk)
                    preferred_element_type=jnp.float32)
        h = jnp.maximum(h + b1_ref[...], 0.0)
        acc_ref[...] += jnp.dot(h.astype(w2_ref.dtype), w2_ref[...],
                                preferred_element_type=jnp.float32)

        @pl.when(k == pl.num_programs(1) - 1)
        def _():
            r = acc_ref[...] + b2_ref[...] + x
            _layernorm_write(r, x, g_ref, beta_ref, o_ref, d_real, d_pad)

    return kernel


def position_wise_feed_forward(x, w1, b1, w2, b2, gamma, beta, *,
                               tm=None, tk=512,
                               weight_dtype=jnp.bfloat16,
                               vmem_limit_bytes=None,
                               force_streamed=False):
    """x: (B, S, D) float32. Weights in (in, out) layout: w1 (D, H), w2 (H, D)."""
    B, S, D = x.shape
    H = w1.shape[1]
    rows = B * S

    Dp = _round_up(D, 128)
    Hp128 = _round_up(H, 128)
    w_itemsize = jnp.dtype(weight_dtype).itemsize

    # ---- generation-aware budgeting ----
    cap = _vmem_capacity_bytes()
    big_vmem = cap >= 96 * 1024 * 1024                  # v5e / v6e (128 MiB per core)
    if vmem_limit_bytes is None:
        vmem_limit_bytes = (110 if big_vmem else 56) * 1024 * 1024
    budget = int(vmem_limit_bytes * 0.9)                # headroom for internal scratch
    if tm is None:
        tm = 512 if big_vmem else 256

    def balanced_tm(target):
        # Balanced row tiling: bounds padded rows to < 8 per tile.
        n = max(1, _cdiv(rows, max(8, target)))
        t = _round_up(_cdiv(rows, n), 8)
        return t, n * t

    def resident_vmem(tm_):
        return (4 * tm_ * Dp * 4                        # x + out, double-buffered
                + tm_ * Hp128 * w_itemsize              # activation scratch (weight dtype)
                + 2 * Dp * Hp128 * w_itemsize           # w1 + w2 resident, Buffered(1)
                + (Hp128 + 3 * Dp) * 4)                 # b1 + b2 + gamma + beta

    def streamed_vmem(tm_, tk_):
        return (4 * tm_ * Dp * 4                        # x + out, double-buffered
                + tm_ * Dp * 4                          # f32 accumulator
                + 4 * Dp * tk_ * w_itemsize             # w1/w2 chunks, double-buffered
                + 2 * tk_ * 4 + 3 * Dp * 4)             # b1 chunks + LN constants

    # ---- choose variant + row tile ----
    use_streamed = bool(force_streamed)
    t_target = tm
    tm_eff, rows_pad = balanced_tm(t_target)
    if not use_streamed:
        while resident_vmem(tm_eff) > budget and t_target > 64:
            t_target //= 2
            tm_eff, rows_pad = balanced_tm(t_target)
        use_streamed = resident_vmem(tm_eff) > budget

    if use_streamed:
        tk_eff = _round_up(max(128, min(tk, Hp128)), 128)
        t_target = tm
        tm_eff, rows_pad = balanced_tm(t_target)
        while streamed_vmem(tm_eff, tk_eff) > budget and t_target > 64:
            t_target //= 2
            tm_eff, rows_pad = balanced_tm(t_target)
        Hp = _round_up(H, tk_eff)
    else:
        tk_eff = None
        Hp = Hp128

    # ---- lane-dense padding (last dims multiples of 128; padded cols/rows are zero) ----
    w1p = jnp.pad(w1, ((0, Dp - D), (0, Hp - H))).astype(weight_dtype)
    w2p = jnp.pad(w2, ((0, Hp - H), (0, Dp - D))).astype(weight_dtype)
    b1p = jnp.pad(b1.reshape(1, H).astype(jnp.float32), ((0, 0), (0, Hp - H)))
    b2p = jnp.pad(b2.reshape(1, D).astype(jnp.float32), ((0, 0), (0, Dp - D)))
    gp = jnp.pad(gamma.reshape(1, D).astype(jnp.float32), ((0, 0), (0, Dp - D)))
    bp = jnp.pad(beta.reshape(1, D).astype(jnp.float32), ((0, 0), (0, Dp - D)))
    x2 = jnp.pad(x.reshape(rows, D).astype(jnp.float32),
                 ((0, rows_pad - rows), (0, Dp - D)))

    cost = pl.CostEstimate(
        flops=4 * rows_pad * Dp * Hp + 8 * rows_pad * Dp,
        transcendentals=rows_pad,
        bytes_accessed=(x2.size * 4 + 2 * Dp * Hp * w_itemsize
                        + (Hp + 3 * Dp) * 4 + rows_pad * Dp * 4),
    )

    def _call(single_buffer_consts):
        const_kw = ({"pipeline_mode": pl.Buffered(1)} if single_buffer_consts else {})

        if not use_streamed:
            kernel = _make_resident_kernel(D, Dp)
            grid = (rows_pad // tm_eff,)
            in_specs = [
                pl.BlockSpec((tm_eff, Dp), lambda i: (i, 0)),             # x row tile
                pl.BlockSpec((Dp, Hp), lambda i: (0, 0), **const_kw),     # w1 (resident)
                pl.BlockSpec((1, Hp), lambda i: (0, 0), **const_kw),      # b1
                pl.BlockSpec((Hp, Dp), lambda i: (0, 0), **const_kw),     # w2 (resident)
                pl.BlockSpec((1, Dp), lambda i: (0, 0), **const_kw),      # b2
                pl.BlockSpec((1, Dp), lambda i: (0, 0), **const_kw),      # gamma
                pl.BlockSpec((1, Dp), lambda i: (0, 0), **const_kw),      # beta
            ]
            out_spec = pl.BlockSpec((tm_eff, Dp), lambda i: (i, 0))
            scratch = [pltpu.VMEM((tm_eff, Hp), weight_dtype)]
            semantics = ("parallel",)
        else:
            kernel = _make_streamed_kernel(D, Dp)
            grid = (rows_pad // tm_eff, Hp // tk_eff)
            in_specs = [
                pl.BlockSpec((tm_eff, Dp), lambda i, k: (i, 0)),          # x (reused over k)
                pl.BlockSpec((Dp, tk_eff), lambda i, k: (0, k)),          # w1 column chunk
                pl.BlockSpec((1, tk_eff), lambda i, k: (0, k)),           # b1 chunk
                pl.BlockSpec((tk_eff, Dp), lambda i, k: (k, 0)),          # w2 row chunk
                pl.BlockSpec((1, Dp), lambda i, k: (0, 0), **const_kw),   # b2
                pl.BlockSpec((1, Dp), lambda i, k: (0, 0), **const_kw),   # gamma
                pl.BlockSpec((1, Dp), lambda i, k: (0, 0), **const_kw),   # beta
            ]
            out_spec = pl.BlockSpec((tm_eff, Dp), lambda i, k: (i, 0))
            scratch = [pltpu.VMEM((tm_eff, Dp), jnp.float32)]             # f32 accumulator
            semantics = ("parallel", "arbitrary")

        return pl.pallas_call(
            kernel,
            out_shape=jax.ShapeDtypeStruct((rows_pad, Dp), x.dtype),
            grid_spec=pltpu.PrefetchScalarGridSpec(
                num_scalar_prefetch=0,
                grid=grid,
                in_specs=in_specs,
                out_specs=out_spec,
                scratch_shapes=scratch,
            ),
            compiler_params=pltpu.CompilerParams(
                dimension_semantics=semantics,
                vmem_limit_bytes=int(vmem_limit_bytes),
            ),
            cost_estimate=cost,
        )(x2, w1p, b1p, w2p, b2p, gp, bp)

    try:
        out = _call(True)
    except Exception:
        # Fallback for Pallas versions that reject pipeline_mode / Buffered(1):
        # let the runtime double-buffer the constant-index blocks.
        out = _call(False)

    return out[:rows, :D].reshape(B, S, D)


def _reference(x, w1, b1, w2, b2, gamma, beta):
    h = jnp.maximum(x @ w1 + b1, 0.0)
    y = h @ w2 + b2
    r = y + x
    mean = jnp.mean(r, axis=-1, keepdims=True)
    var = jnp.var(r, axis=-1, keepdims=True)
    normed = (r - mean) / jnp.sqrt(var + 1e-5)
    return normed * gamma + beta


def _make_params(key, D, Hid):
    # PyTorch Linear init: uniform(-1/sqrt(fan_in), 1/sqrt(fan_in)); LayerNorm: ones/zeros.
    k1, k2, k3, k4 = jax.random.split(key, 4)
    lim1 = 1.0 / (D ** 0.5)
    lim2 = 1.0 / (Hid ** 0.5)
    w1 = jax.random.uniform(k1, (D, Hid), jnp.float32, -lim1, lim1)
    b1 = jax.random.uniform(k2, (Hid,), jnp.float32, -lim1, lim1)
    w2 = jax.random.uniform(k3, (Hid, D), jnp.float32, -lim2, lim2)
    b2 = jax.random.uniform(k4, (D,), jnp.float32, -lim2, lim2)
    gamma = jnp.ones((D,), jnp.float32)
    beta = jnp.zeros((D,), jnp.float32)
    return w1, b1, w2, b2, gamma, beta


if __name__ == "__main__":
    key = jax.random.PRNGKey(0)

    # --- case 1: small shape, resident-weight path (f32 exact + bf16 fast path) ---
    B, S, D, Hid = 2, 8, 32, 64
    kx, kp, krest = jax.random.split(key, 3)
    x = jax.random.normal(kx, (B, S, D), dtype=jnp.float32)
    w1, b1, w2, b2, gamma, beta = _make_params(kp, D, Hid)
    ref = _reference(x, w1, b1, w2, b2, gamma, beta)

    out_f32 = position_wise_feed_forward(x, w1, b1, w2, b2, gamma, beta,
                                         weight_dtype=jnp.float32)
    out_f32 = jax.block_until_ready(out_f32)
    assert out_f32.shape == (B, S, D)
    assert jnp.allclose(out_f32, ref, atol=1e-5, rtol=1e-5), "resident f32 mismatch"

    out_bf16 = position_wise_feed_forward(x, w1, b1, w2, b2, gamma, beta,
                                          weight_dtype=jnp.bfloat16)
    out_bf16 = jax.block_until_ready(out_bf16)
    assert out_bf16.shape == (B, S, D)
    assert bool(jnp.all(jnp.isfinite(out_bf16)))
    assert jnp.allclose(out_bf16, ref, atol=5e-2, rtol=5e-2), "resident bf16 mismatch"

    # --- case 2: exercise the hidden-dim streamed (K-tiled) variant used for large D/H ---
    D2, Hid2 = 32, 320                       # Hp=384 with tk=128 -> 3 k-chunks
    kx2, kp2 = jax.random.split(krest)
    x2 = jax.random.normal(kx2, (B, S, D2), dtype=jnp.float32)
    w1b, b1b, w2b, b2b, gammab, betab = _make_params(kp2, D2, Hid2)
    ref2 = _reference(x2, w1b, b1b, w2b, b2b, gammab, betab)
    out_str = position_wise_feed_forward(x2, w1b, b1b, w2b, b2b, gammab, betab,
                                         weight_dtype=jnp.float32,
                                         force_streamed=True, tk=128)
    out_str = jax.block_until_ready(out_str)
    assert out_str.shape == (B, S, D2)
    assert jnp.allclose(out_str, ref2, atol=1e-4, rtol=1e-4), "streamed f32 mismatch"

    print("KERNEL_OK")
</pallas_src>

<mosaic_0001>
module attributes {stable_mosaic.version = 11 : i64} {
  func.func @kernel(%arg0: i32, %arg1: memref<16x128xf32, #tpu.memory_space<vmem>>, %arg2: memref<128x128xf32, #tpu.memory_space<vmem>>, %arg3: memref<1x128xf32, #tpu.memory_space<vmem>>, %arg4: memref<128x128xf32, #tpu.memory_space<vmem>>, %arg5: memref<1x128xf32, #tpu.memory_space<vmem>>, %arg6: memref<1x128xf32, #tpu.memory_space<vmem>>, %arg7: memref<1x128xf32, #tpu.memory_space<vmem>>, %arg8: memref<16x128xf32, #tpu.memory_space<vmem>>, %arg9: memref<16x128xf32, #tpu.memory_space<vmem>>) attributes {dimension_semantics = [#tpu.dimension_semantics<parallel>], iteration_bounds = array<i64: 1>, scalar_prefetch = 0 : i64, scratch_operands = 1 : i64, tpu.core_type = #tpu.core_type<tc>, window_params = [{transform_indices = @transform_0, window_bounds = array<i64: 16, 128>}, {pipeline_mode = #tpu.pipeline_mode<synchronous>, transform_indices = @transform_1, window_bounds = array<i64: 128, 128>}, {pipeline_mode = #tpu.pipeline_mode<synchronous>, transform_indices = @transform_2, window_bounds = array<i64: 1, 128>}, {pipeline_mode = #tpu.pipeline_mode<synchronous>, transform_indices = @transform_3, window_bounds = array<i64: 128, 128>}, {pipeline_mode = #tpu.pipeline_mode<synchronous>, transform_indices = @transform_4, window_bounds = array<i64: 1, 128>}, {pipeline_mode = #tpu.pipeline_mode<synchronous>, transform_indices = @transform_5, window_bounds = array<i64: 1, 128>}, {pipeline_mode = #tpu.pipeline_mode<synchronous>, transform_indices = @transform_6, window_bounds = array<i64: 1, 128>}, {transform_indices = @transform_7, window_bounds = array<i64: 16, 128>}]} {
    %c0 = arith.constant 0 : index
    %c0_0 = arith.constant 0 : index
    %0 = vector.load %arg1[%c0, %c0_0] : memref<16x128xf32, #tpu.memory_space<vmem>>, vector<16x128xf32>
    %c0_1 = arith.constant 0 : index
    %c0_2 = arith.constant 0 : index
    %1 = vector.load %arg2[%c0_1, %c0_2] : memref<128x128xf32, #tpu.memory_space<vmem>>, vector<128x128xf32>
    %cst = arith.constant dense<0.000000e+00> : vector<16x128xf32>
    %2 = tpu.matmul %0, %1, %cst {dimension_numbers = #tpu.dot_dimension_numbers<[1], [0], [0], [1], [0, 0, 1, 1], [], []>} : vector<16x128xf32>, vector<128x128xf32>, vector<16x128xf32> -> vector<16x128xf32>
    %c0_3 = arith.constant 0 : index
    %c0_4 = arith.constant 0 : index
    %3 = vector.load %arg3[%c0_3, %c0_4] : memref<1x128xf32, #tpu.memory_space<vmem>>, vector<1x128xf32>
    %4 = vector.broadcast %3 : vector<1x128xf32> to vector<16x128xf32>
    %5 = arith.addf %2, %4 : vector<16x128xf32>
    %cst_5 = arith.constant 0.000000e+00 : f32
    %6 = vector.broadcast %cst_5 : f32 to vector<16x128xf32>
    %7 = arith.maximumf %5, %6 : vector<16x128xf32>
    %c0_6 = arith.constant 0 : index
    %c0_7 = arith.constant 0 : index
    %8 = vector.load %arg9[%c0_6, %c0_7] : memref<16x128xf32, #tpu.memory_space<vmem>>, vector<16x128xf32>
    tpu.vector_store %arg9[%c0_6, %c0_7], %7 {strides = array<i32>} : memref<16x128xf32, #tpu.memory_space<vmem>>, vector<16x128xf32>,
    %c0_8 = arith.constant 0 : index
    %c0_9 = arith.constant 0 : index
    %9 = vector.load %arg9[%c0_8, %c0_9] : memref<16x128xf32, #tpu.memory_space<vmem>>, vector<16x128xf32>
    %c0_10 = arith.constant 0 : index
    %c0_11 = arith.constant 0 : index
    %10 = vector.load %arg4[%c0_10, %c0_11] : memref<128x128xf32, #tpu.memory_space<vmem>>, vector<128x128xf32>
    %cst_12 = arith.constant dense<0.000000e+00> : vector<16x128xf32>
    %11 = tpu.matmul %9, %10, %cst_12 {dimension_numbers = #tpu.dot_dimension_numbers<[1], [0], [0], [1], [0, 0, 1, 1], [], []>} : vector<16x128xf32>, vector<128x128xf32>, vector<16x128xf32> -> vector<16x128xf32>
    %c0_13 = arith.constant 0 : index
    %c0_14 = arith.constant 0 : index
    %12 = vector.load %arg5[%c0_13, %c0_14] : memref<1x128xf32, #tpu.memory_space<vmem>>, vector<1x128xf32>
    %13 = vector.broadcast %12 : vector<1x128xf32> to vector<16x128xf32>
    %14 = arith.addf %11, %13 : vector<16x128xf32>
    %15 = arith.addf %14, %0 : vector<16x128xf32>
    %cst_15 = arith.constant dense<0.000000e+00> : vector<16xf32>
    %16 = vector.multi_reduction <add>, %15, %cst_15 [1] : vector<16x128xf32> to vector<16xf32>
    %17 = vector.shape_cast %16 : vector<16xf32> to vector<16x1xf32>
    %cst_16 = arith.constant 3.125000e-02 : f32
    %18 = vector.broadcast %cst_16 : f32 to vector<16x1xf32>
    %19 = arith.mulf %17, %18 : vector<16x1xf32>
    %20 = vector.broadcast %19 : vector<16x1xf32> to vector<16x128xf32>
    %21 = arith.subf %15, %20 : vector<16x128xf32>
    %22 = tpu.iota {dimensions = array<i32: 1>} : vector<1x128xi32>
    %c32_i32 = arith.constant 32 : i32
    %23 = vector.broadcast %c32_i32 : i32 to vector<1x128xi32>
    %24 = arith.cmpi slt, %22, %23 : vector<1x128xi32>
    %25 = arith.extui %24 : vector<1x128xi1> to vector<1x128xi32>
    %26 = arith.sitofp %25 : vector<1x128xi32> to vector<1x128xf32>
    %27 = vector.broadcast %26 : vector<1x128xf32> to vector<16x128xf32>
    %28 = arith.mulf %21, %27 : vector<16x128xf32>
    %29 = arith.mulf %28, %28 : vector<16x128xf32>
    %cst_17 = arith.constant dense<0.000000e+00> : vector<16xf32>
    %30 = vector.multi_reduction <add>, %29, %cst_17 [1] : vector<16x128xf32> to vector<16xf32>
    %31 = vector.shape_cast %30 : vector<16xf32> to vector<16x1xf32>
    %cst_18 = arith.constant 3.125000e-02 : f32
    %32 = vector.broadcast %cst_18 : f32 to vector<16x1xf32>
    %33 = arith.mulf %31, %32 : vector<16x1xf32>
    %cst_19 = arith.constant 9.99999974E-6 : f32
    %34 = vector.broadcast %cst_19 : f32 to vector<16x1xf32>
    %35 = arith.addf %33, %34 : vector<16x1xf32>
    %36 = math.rsqrt %35 : vector<16x1xf32>
    %c0_20 = arith.constant 0 : index
    %c0_21 = arith.constant 0 : index
    %37 = vector.load %arg6[%c0_20, %c0_21] : memref<1x128xf32, #tpu.memory_space<vmem>>, vector<1x128xf32>
    %38 = vector.broadcast %36 : vector<16x1xf32> to vector<16x128xf32>
    %39 = vector.broadcast %37 : vector<1x128xf32> to vector<16x128xf32>
    %40 = arith.mulf %38, %39 : vector<16x128xf32>
    %41 = arith.mulf %28, %40 : vector<16x128xf32>
    %c0_22 = arith.constant 0 : index
    %c0_23 = arith.constant 0 : index
    %42 = vector.load %arg7[%c0_22, %c0_23] : memref<1x128xf32, #tpu.memory_space<vmem>>, vector<1x128xf32>
    %43 = vector.broadcast %42 : vector<1x128xf32> to vector<16x128xf32>
    %44 = arith.addf %41, %43 : vector<16x128xf32>
    %c0_24 = arith.constant 0 : index
    %c0_25 = arith.constant 0 : index
    %45 = vector.load %arg8[%c0_24, %c0_25] : memref<16x128xf32, #tpu.memory_space<vmem>>, vector<16x128xf32>
    tpu.vector_store %arg8[%c0_24, %c0_25], %44 {strides = array<i32>} : memref<16x128xf32, #tpu.memory_space<vmem>>, vector<16x128xf32>,
    return
  }
  func.func @transform_0(%arg0: i32) -> (i32, i32) {
    %c0_i32 = arith.constant 0 : i32
    %c0_i32_0 = arith.constant 0 : i32
    return %arg0, %c0_i32 : i32, i32
  }
  func.func @transform_1(%arg0: i32) -> (i32, i32) {
    %c0_i32 = arith.constant 0 : i32
    %c0_i32_0 = arith.constant 0 : i32
    %c0_i32_1 = arith.constant 0 : i32
    return %c0_i32, %c0_i32_0 : i32, i32
  }
  func.func @transform_2(%arg0: i32) -> (i32, i32) {
    %c0_i32 = arith.constant 0 : i32
    %c0_i32_0 = arith.constant 0 : i32
    %c0_i32_1 = arith.constant 0 : i32
    return %c0_i32, %c0_i32_0 : i32, i32
  }
  func.func @transform_3(%arg0: i32) -> (i32, i32) {
    %c0_i32 = arith.constant 0 : i32
    %c0_i32_0 = arith.constant 0 : i32
    %c0_i32_1 = arith.constant 0 : i32
    return %c0_i32, %c0_i32_0 : i32, i32
  }
  func.func @transform_4(%arg0: i32) -> (i32, i32) {
    %c0_i32 = arith.constant 0 : i32
    %c0_i32_0 = arith.constant 0 : i32
    %c0_i32_1 = arith.constant 0 : i32
    return %c0_i32, %c0_i32_0 : i32, i32
  }
  func.func @transform_5(%arg0: i32) -> (i32, i32) {
    %c0_i32 = arith.constant 0 : i32
    %c0_i32_0 = arith.constant 0 : i32
    %c0_i32_1 = arith.constant 0 : i32
    return %c0_i32, %c0_i32_0 : i32, i32
  }
  func.func @transform_6(%arg0: i32) -> (i32, i32) {
    %c0_i32 = arith.constant 0 : i32
    %c0_i32_0 = arith.constant 0 : i32
    %c0_i32_1 = arith.constant 0 : i32
    return %c0_i32, %c0_i32_0 : i32, i32
  }
  func.func @transform_7(%arg0: i32) -> (i32, i32) {
    %c0_i32 = arith.constant 0 : i32
    %c0_i32_0 = arith.constant 0 : i32
    return %arg0, %c0_i32 : i32, i32
  }
}

module attributes {stable_mosaic.version = 11 : i64} {
  func.func @kernel(%arg0: i32, %arg1: memref<16x128xf32, #tpu.memory_space<vmem>>, %arg2: memref<128x128xf32, #tpu.memory_space<vmem>>, %arg3: memref<1x128xf32, #tpu.memory_space<vmem>>, %arg4: memref<128x128xf32, #tpu.memory_space<vmem>>, %arg5: memref<1x128xf32, #tpu.memory_space<vmem>>, %arg6: memref<1x128xf32, #tpu.memory_space<vmem>>, %arg7: memref<1x128xf32, #tpu.memory_space<vmem>>, %arg8: memref<16x128xf32, #tpu.memory_space<vmem>>, %arg9: memref<16x128xf32, #tpu.memory_space<vmem>>) attributes {dimension_semantics = [#tpu.dimension_semantics<parallel>], iteration_bounds = array<i64: 1>, scalar_prefetch = 0 : i64, scratch_operands = 1 : i64, tpu.core_type = #tpu.core_type<tc>, window_params = [{transform_indices = @transform_0, window_bounds = array<i64: 16, 128>}, {pipeline_mode = #tpu.pipeline_mode<synchronous>, transform_indices = @transform_1, window_bounds = array<i64: 128, 128>}, {pipeline_mode = #tpu.pipeline_mode<synchronous>, transform_indices = @transform_2, window_bounds = array<i64: 1, 128>}, {pipeline_mode = #tpu.pipeline_mode<synchronous>, transform_indices = @transform_3, window_bounds = array<i64: 128, 128>}, {pipeline_mode = #tpu.pipeline_mode<synchronous>, transform_indices = @transform_4, window_bounds = array<i64: 1, 128>}, {pipeline_mode = #tpu.pipeline_mode<synchronous>, transform_indices = @transform_5, window_bounds = array<i64: 1, 128>}, {pipeline_mode = #tpu.pipeline_mode<synchronous>, transform_indices = @transform_6, window_bounds = array<i64: 1, 128>}, {transform_indices = @transform_7, window_bounds = array<i64: 16, 128>}]} {
    %c0 = arith.constant 0 : index
    %c0_0 = arith.constant 0 : index
    %0 = vector.load %arg1[%c0, %c0_0] : memref<16x128xf32, #tpu.memory_space<vmem>>, vector<16x128xf32>
    %c0_1 = arith.constant 0 : index
    %c0_2 = arith.constant 0 : index
    %1 = vector.load %arg2[%c0_1, %c0_2] : memref<128x128xf32, #tpu.memory_space<vmem>>, vector<128x128xf32>
    %cst = arith.constant dense<0.000000e+00> : vector<16x128xf32>
    %2 = tpu.matmul %0, %1, %cst {dimension_numbers = #tpu.dot_dimension_numbers<[1], [0], [0], [1], [0, 0, 1, 1], [], []>} : vector<16x128xf32>, vector<128x128xf32>, vector<16x128xf32> -> vector<16x128xf32>
    %c0_3 = arith.constant 0 : index
    %c0_4 = arith.constant 0 : index
    %3 = vector.load %arg3[%c0_3, %c0_4] : memref<1x128xf32, #tpu.memory_space<vmem>>, vector<1x128xf32>
    %4 = vector.broadcast %3 : vector<1x128xf32> to vector<16x128xf32>
    %5 = arith.addf %2, %4 : vector<16x128xf32>
    %cst_5 = arith.constant 0.000000e+00 : f32
    %6 = vector.broadcast %cst_5 : f32 to vector<16x128xf32>
    %7 = arith.maximumf %5, %6 : vector<16x128xf32>
    %c0_6 = arith.constant 0 : index
    %c0_7 = arith.constant 0 : index
    %8 = vector.load %arg9[%c0_6, %c0_7] : memref<16x128xf32, #tpu.memory_space<vmem>>, vector<16x128xf32>
    tpu.vector_store %arg9[%c0_6, %c0_7], %7 {strides = array<i32>} : memref<16x128xf32, #tpu.memory_space<vmem>>, vector<16x128xf32>,
    %c0_8 = arith.constant 0 : index
    %c0_9 = arith.constant 0 : index
    %9 = vector.load %arg9[%c0_8, %c0_9] : memref<16x128xf32, #tpu.memory_space<vmem>>, vector<16x128xf32>
    %c0_10 = arith.constant 0 : index
    %c0_11 = arith.constant 0 : index
    %10 = vector.load %arg4[%c0_10, %c0_11] : memref<128x128xf32, #tpu.memory_space<vmem>>, vector<128x128xf32>
    %cst_12 = arith.constant dense<0.000000e+00> : vector<16x128xf32>
    %11 = tpu.matmul %9, %10, %cst_12 {dimension_numbers = #tpu.dot_dimension_numbers<[1], [0], [0], [1], [0, 0, 1, 1], [], []>} : vector<16x128xf32>, vector<128x128xf32>, vector<16x128xf32> -> vector<16x128xf32>
    %c0_13 = arith.constant 0 : index
    %c0_14 = arith.constant 0 : index
    %12 = vector.load %arg5[%c0_13, %c0_14] : memref<1x128xf32, #tpu.memory_space<vmem>>, vector<1x128xf32>
    %13 = vector.broadcast %12 : vector<1x128xf32> to vector<16x128xf32>
    %14 = arith.addf %11, %13 : vector<16x128xf32>
    %15 = arith.addf %14, %0 : vector<16x128xf32>
    %cst_15 = arith.constant dense<0.000000e+00> : vector<16xf32>
    %16 = vector.multi_reduction <add>, %15, %cst_15 [1] : vector<16x128xf32> to vector<16xf32>
    %17 = vector.shape_cast %16 : vector<16xf32> to vector<16x1xf32>
    %cst_16 = arith.constant 3.125000e-02 : f32
    %18 = vector.broadcast %cst_16 : f32 to vector<16x1xf32>
    %19 = arith.mulf %17, %18 : vector<16x1xf32>
    %20 = vector.broadcast %19 : vector<16x1xf32> to vector<16x128xf32>
    %21 = arith.subf %15, %20 : vector<16x128xf32>
    %22 = tpu.iota {dimensions = array<i32: 1>} : vector<1x128xi32>
    %c32_i32 = arith.constant 32 : i32
    %23 = vector.broadcast %c32_i32 : i32 to vector<1x128xi32>
    %24 = arith.cmpi slt, %22, %23 : vector<1x128xi32>
    %25 = arith.extui %24 : vector<1x128xi1> to vector<1x128xi32>
    %26 = arith.sitofp %25 : vector<1x128xi32> to vector<1x128xf32>
    %27 = vector.broadcast %26 : vector<1x128xf32> to vector<16x128xf32>
    %28 = arith.mulf %21, %27 : vector<16x128xf32>
    %29 = arith.mulf %28, %28 : vector<16x128xf32>
    %cst_17 = arith.constant dense<0.000000e+00> : vector<16xf32>
    %30 = vector.multi_reduction <add>, %29, %cst_17 [1] : vector<16x128xf32> to vector<16xf32>
    %31 = vector.shape_cast %30 : vector<16xf32> to vector<16x1xf32>
    %cst_18 = arith.constant 3.125000e-02 : f32
    %32 = vector.broadcast %cst_18 : f32 to vector<16x1xf32>
    %33 = arith.mulf %31, %32 : vector<16x1xf32>
    %cst_19 = arith.constant 9.99999974E-6 : f32
    %34 = vector.broadcast %cst_19 : f32 to vector<16x1xf32>
    %35 = arith.addf %33, %34 : vector<16x1xf32>
    %36 = math.rsqrt %35 : vector<16x1xf32>
    %c0_20 = arith.constant 0 : index
    %c0_21 = arith.constant 0 : index
    %37 = vector.load %arg6[%c0_20, %c0_21] : memref<1x128xf32, #tpu.memory_space<vmem>>, vector<1x128xf32>
    %38 = vector.broadcast %36 : vector<16x1xf32> to vector<16x128xf32>
    %39 = vector.broadcast %37 : vector<1x128xf32> to vector<16x128xf32>
    %40 = arith.mulf %38, %39 : vector<16x128xf32>
    %41 = arith.mulf %28, %40 : vector<16x128xf32>
    %c0_22 = arith.constant 0 : index
    %c0_23 = arith.constant 0 : index
    %42 = vector.load %arg7[%c0_22, %c0_23] : memref<1x128xf32, #tpu.memory_space<vmem>>, vector<1x128xf32>
    %43 = vector.broadcast %42 : vector<1x128xf32> to vector<16x128xf32>
    %44 = arith.addf %41, %43 : vector<16x128xf32>
    %c0_24 = arith.constant 0 : index
    %c0_25 = arith.constant 0 : index
    %45 = vector.load %arg8[%c0_24, %c0_25] : memref<16x128xf32, #tpu.memory_space<vmem>>, vector<16x128xf32>
    tpu.vector_store %arg8[%c0_24, %c0_25], %44 {strides = array<i32>} : memref<16x128xf32, #tpu.memory_space<vmem>>, vector<16x128xf32>,
    return
  }
  func.func @transform_0(%arg0: i32) -> (i32, i32) {
    %c0_i32 = arith.constant 0 : i32
    %c0_i32_0 = arith.constant 0 : i32
    return %arg0, %c0_i32 : i32, i32
  }
  func.func @transform_1(%arg0: i32) -> (i32, i32) {
    %c0_i32 = arith.constant 0 : i32
    %c0_i32_0 = arith.constant 0 : i32
    %c0_i32_1 = arith.constant 0 : i32
    return %c0_i32, %c0_i32_0 : i32, i32
  }
  func.func @transform_2(%arg0: i32) -> (i32, i32) {
    %c0_i32 = arith.constant 0 : i32
    %c0_i32_0 = arith.constant 0 : i32
    %c0_i32_1 = arith.constant 0 : i32
    return %c0_i32, %c0_i32_0 : i32, i32
  }
  func.func @transform_3(%arg0: i32) -> (i32, i32) {
    %c0_i32 = arith.constant 0 : i32
    %c0_i32_0 = arith.constant 0 : i32
    %c0_i32_1 = arith.constant 0 : i32
    return %c0_i32, %c0_i32_0 : i32, i32
  }
  func.func @transform_4(%arg0: i32) -> (i32, i32) {
    %c0_i32 = arith.constant 0 : i32
    %c0_i32_0 = arith.constant 0 : i32
    %c0_i32_1 = arith.constant 0 : i32
    return %c0_i32, %c0_i32_0 : i32, i32
  }
  func.func @transform_5(%arg0: i32) -> (i32, i32) {
    %c0_i32 = arith.constant 0 : i32
    %c0_i32_0 = arith.constant 0 : i32
    %c0_i32_1 = arith.constant 0 : i32
    return %c0_i32, %c0_i32_0 : i32, i32
  }
  func.func @transform_6(%arg0: i32) -> (i32, i32) {
    %c0_i32 = arith.constant 0 : i32
    %c0_i32_0 = arith.constant 0 : i32
    %c0_i32_1 = arith.constant 0 : i32
    return %c0_i32, %c0_i32_0 : i32, i32
  }
  func.func @transform_7(%arg0: i32) -> (i32, i32) {
    %c0_i32 = arith.constant 0 : i32
    %c0_i32_0 = arith.constant 0 : i32
    return %arg0, %c0_i32 : i32, i32
  }
}

</mosaic_0001>

<llo_original>
// kernel: tpu_custom_call.1
$region0: #{tpu_custom_call.1}
  #allocation0 [shape = 'u32[]', space=smem, size = 0x4, offset = 0x4, fixed_abs, tag = 'smem constant byte address 0x4 - core index']
  #allocation1 [shape = 'u32[72,128]{1,0:T(1,128)}', space=vmem, size = 0x9000, scoped, tag = 'internal scratch']
  #allocation2 [shape = 'f32[16,128]{1,0:T(8,128)}', space=vmem, size = 0x2000, scoped, tag = 'scratch operand']
  %s0 = inlined_call_operand.hbm [shape: f32[16,128], index: 0, kind: input, shape index: {}]
  %s1 = inlined_call_operand.hbm [shape: f32[128,128], index: 1, kind: input, shape index: {}]
  %s2 = inlined_call_operand.vmem [shape: f32[1,128], index: 2, kind: input, shape index: {}]
  %s3 = inlined_call_operand.hbm [shape: f32[128,128], index: 3, kind: input, shape index: {}]
  %s4 = inlined_call_operand.vmem [shape: f32[1,128], index: 4, kind: input, shape index: {}]
  %s5 = inlined_call_operand.vmem [shape: f32[1,128], index: 5, kind: input, shape index: {}]
  %s6 = inlined_call_operand.vmem [shape: f32[1,128], index: 6, kind: input, shape index: {}]
  %s7 = inlined_call_operand.hbm [shape: f32[16,128], index: 7, kind: output, shape index: {}]
  %s8 = sld [smem:[#allocation0]]
  $region50: #{tpu_custom_call.1} parent=0
    _
  %s10 = ssub.s32 1, %s8
  %s11 = scalar_select 0, %s10, %s8
  $region1: #{tpu_custom_call.1} parent=0
    #allocation3 [shape = 'u8[8192]{0}', space=vmem, size = 0x2000, scoped, tag = 'input window, operand 0, single buffered']
    #allocation4 [shape = 's32[1]{0}', space=sflag, size = 0x4, scoped, tag = 'scoped memory for tpu_custom_call.1']
    #allocation5 [shape = 's32[1]{0}', space=sflag, size = 0x4, scoped, tag = 'scoped memory for tpu_custom_call.1']
    #allocation6 [shape = 'u8[65536]{0}', space=vmem, size = 0x10000, scoped, tag = 'input window, operand 1, single buffered']
    #allocation7 [shape = 's32[1]{0}', space=sflag, size = 0x4, scoped, tag = 'scoped memory for tpu_custom_call.1']
    #allocation8 [shape = 'u8[65536]{0}', space=vmem, size = 0x10000, scoped, tag = 'input window, operand 3, single buffered']
    #allocation9 [shape = 'u8[8192]{0}', space=vmem, size = 0x2000, scoped, tag = 'output window, operand 0, single buffered']
    %12 = vsyncpa [#allocation4], 0
    %13 = vsyncpa [#allocation7], 0
    %14 = vsyncpa [#allocation5], 0
    // Predicated region
    $region2: #{tpu_custom_call.1} parent=1 // pred_check
      _
    $region3: #{tpu_custom_call.1} parent=1 // pred_check_branch
      %16 = sbr.rel (0) target = $region5
    $region4: #{tpu_custom_call.1} parent=1 // pred_region
      %18 = vsyncadd [#allocation4], 0
      %s19 = sshll.u32 %s0, 4
      %s20 = int_to_ptr.hbm [resolvable:$true] %s19
      %s21 = sshll.u32 [#allocation3], 4
      %s22 = int_to_ptr.vmem [resolvable:$true] %s21
      %27 = dma.hbm_to_vmem [thread:$0]  %s20, 256, %s22, [#allocation4], 128, 128, 8
    $region5: #{tpu_custom_call.1} parent=1 // pred_fallthru
      _
    // Predicated region
    $region6: #{tpu_custom_call.1} parent=1 // pred_check
      _
    $region7: #{tpu_custom_call.1} parent=1 // pred_check_branch
      %29 = sbr.rel (0) target = $region9
    $region8: #{tpu_custom_call.1} parent=1 // pred_region
      %31 = vsyncadd [#allocation7], 0
      %s32 = sshll.u32 %s1, 4
      %s33 = int_to_ptr.hbm [resolvable:$true] %s32
      %s34 = sshll.u32 [#allocation6], 4
      %s35 = int_to_ptr.vmem [resolvable:$true] %s34
      %40 = dma.hbm_to_vmem [thread:$0]  %s33, 2048, %s35, [#allocation7], 128, 128, 8
    $region9: #{tpu_custom_call.1} parent=1 // pred_fallthru
      _
    // Predicated region
    $region10: #{tpu_custom_call.1} parent=1 // pred_check
      _
    $region11: #{tpu_custom_call.1} parent=1 // pred_check_branch
      %42 = sbr.rel (0) target = $region13
    $region12: #{tpu_custom_call.1} parent=1 // pred_region
      _
    $region13: #{tpu_custom_call.1} parent=1 // pred_fallthru
      _
    // Predicated region
    $region14: #{tpu_custom_call.1} parent=1 // pred_check
      _
    $region15: #{tpu_custom_call.1} parent=1 // pred_check_branch
      %44 = sbr.rel (0) target = $region17
    $region16: #{tpu_custom_call.1} parent=1 // pred_region
      %46 = vsyncadd [#allocation7], 0
      %s47 = sshll.u32 %s3, 4
      %s48 = int_to_ptr.hbm [resolvable:$true] %s47
      %s49 = sshll.u32 [#allocation8], 4
      %s50 = int_to_ptr.vmem [resolvable:$true] %s49
      %55 = dma.hbm_to_vmem [thread:$0]  %s48, 2048, %s50, [#allocation7], 128, 128, 8
    $region17: #{tpu_custom_call.1} parent=1 // pred_fallthru
      _
    // Predicated region
    $region18: #{tpu_custom_call.1} parent=1 // pred_check
      _
    $region19: #{tpu_custom_call.1} parent=1 // pred_check_branch
      %57 = sbr.rel (0) target = $region21
    $region20: #{tpu_custom_call.1} parent=1 // pred_region
      _
    $region21: #{tpu_custom_call.1} parent=1 // pred_fallthru
      _
    // Predicated region
    $region22: #{tpu_custom_call.1} parent=1 // pred_check
      _
    $region23: #{tpu_custom_call.1} parent=1 // pred_check_branch
      %59 = sbr.rel (0) target = $region25
    $region24: #{tpu_custom_call.1} parent=1 // pred_region
      _
    $region25: #{tpu_custom_call.1} parent=1 // pred_fallthru
      _
    // Predicated region
    $region26: #{tpu_custom_call.1} parent=1 // pred_check
      _
    $region27: #{tpu_custom_call.1} parent=1 // pred_check_branch
      %61 = sbr.rel (0) target = $region29
    $region28: #{tpu_custom_call.1} parent=1 // pred_region
      _
    $region29: #{tpu_custom_call.1} parent=1 // pred_fallthru
      _
    // Predicated region
    $region30: #{tpu_custom_call.1} parent=1 // pred_check
      _
    $region31: #{tpu_custom_call.1} parent=1 // pred_check_branch
      %63 = sbr.rel (0) target = $region33
    $region32: #{tpu_custom_call.1} parent=1 // pred_region
      %65 = dma.done [#allocation4], 256
    $region33: #{tpu_custom_call.1} parent=1 // pred_fallthru
      _
    // Predicated region
    $region34: #{tpu_custom_call.1} parent=1 // pred_check
      _
    $region35: #{tpu_custom_call.1} parent=1 // pred_check_branch
      %67 = sbr.rel (0) target = $region37
    $region36: #{tpu_custom_call.1} parent=1 // pred_region
      %69 = dma.done [#allocation7], 2048
    $region37: #{tpu_custom_call.1} parent=1 // pred_fallthru
      _
    // Predicated region
    $region38: #{tpu_custom_call.1} parent=1 // pred_check
      _
    $region39: #{tpu_custom_call.1} parent=1 // pred_check_branch
      %71 = sbr.rel (0) target = $region41
    $region40: #{tpu_custom_call.1} parent=1 // pred_region
      %73 = dma.done [#allocation7], 2048
    $region41: #{tpu_custom_call.1} parent=1 // pred_fallthru
      _
    %v74 = vld [vmem:[#allocation3] sm:$0xff]
    %v75 = vld [vmem:[#allocation3 + $0x8] sm:$0xff]
    %v76 = vld [vmem:[#allocation6] sm:$0xff]
    %v77 = vld [vmem:[#allocation6 + $0x8] sm:$0xff]
    %v78 = vld [vmem:[#allocation6 + $0x10] sm:$0xff]
    %v79 = vld [vmem:[#allocation6 + $0x18] sm:$0xff]
    %v80 = vld [vmem:[#allocation6 + $0x20] sm:$0xff]
    %v81 = vld [vmem:[#allocation6 + $0x28] sm:$0xff]
    %v82 = vld [vmem:[#allocation6 + $0x30] sm:$0xff]
    %v83 = vld [vmem:[#allocation6 + $0x38] sm:$0xff]
    %v84 = vld [vmem:[#allocation6 + $0x40] sm:$0xff]
    %v85 = vld [vmem:[#allocation6 + $0x48] sm:$0xff]
    %v86 = vld [vmem:[#allocation6 + $0x50] sm:$0xff]
    %v87 = vld [vmem:[#allocation6 + $0x58] sm:$0xff]
    %v88 = vld [vmem:[#allocation6 + $0x60] sm:$0xff]
    %v89 = vld [vmem:[#allocation6 + $0x68] sm:$0xff]
    %v90 = vld [vmem:[#allocation6 + $0x70] sm:$0xff]
    %v91 = vld [vmem:[#allocation6 + $0x78] sm:$0xff]
    %v92 = vld [vmem:[%s2] sm:$0x1]
    %v94 = vperm.slane %v92, 0
    %96 = vmatpush.msra.mxu0 %v91
    %97 = vmatpush.msra.mxu0 %v90
    %98 = vmatpush.msra.mxu0 %v89
    %99 = vmatpush.msra.mxu0 %v88
    %100 = vmatpush.msra.mxu0 %v87
    %101 = vmatpush.msra.mxu0 %v86
    %102 = vmatpush.msra.mxu0 %v85
    %103 = vmatpush.msra.mxu0 %v84
    %104 = vmatpush.msra.mxu0 %v83
    %105 = vmatpush.msra.mxu0 %v82
    %106 = vmatpush.msra.mxu0 %v81
    %107 = vmatpush.msra.mxu0 %v80
    %108 = vmatpush.msra.mxu0 %v79
    %109 = vmatpush.msra.mxu0 %v78
    %110 = vmatpush.msra.mxu0 %v77
    %111 = vmatpush.msra.mxu0 %v76
    %112 = vmatmul.f32.gmra.mxu0 %v74
    %v113 = vpop.f32.mrf.mxu0
    %v114 = vadd.f32 %v94, %v113
    %115 = vmatmul.f32.gmra.mxu0 %v75
    %v116 = vpop.f32.mrf.mxu0
    %v117 = vadd.f32 %v94, %v116
    %118 = vdwg.mxu0
    %v119 = vmax.f32 %v114, 0.0
    %v120 = vmax.f32 %v117, 0.0
    %121 = vst [vmem:[#allocation2] sm:$0xff] %v119
    %122 = vst [vmem:[#allocation2 + $0x8] sm:$0xff] %v120
    %v123 = vld [vmem:[#allocation2] sm:$0xff]
    %v124 = vld [vmem:[#allocation2 + $0x8] sm:$0xff]
    %v125 = vld [vmem:[#allocation8] sm:$0xff]
    %v126 = vld [vmem:[#allocation8 + $0x8] sm:$0xff]
    %v127 = vld [vmem:[#allocation8 + $0x10] sm:$0xff]
    %v128 = vld [vmem:[#allocation8 + $0x18] sm:$0xff]
    %v129 = vld [vmem:[#allocation8 + $0x20] sm:$0xff]
    %v130 = vld [vmem:[#allocation8 + $0x28] sm:$0xff]
    %v131 = vld [vmem:[#allocation8 + $0x30] sm:$0xff]
    %v132 = vld [vmem:[#allocation8 + $0x38] sm:$0xff]
    %v133 = vld [vmem:[#allocation8 + $0x40] sm:$0xff]
    %v134 = vld [vmem:[#allocation8 + $0x48] sm:$0xff]
    %v135 = vld [vmem:[#allocation8 + $0x50] sm:$0xff]
    %v136 = vld [vmem:[#allocation8 + $0x58] sm:$0xff]
    %v137 = vld [vmem:[#allocation8 + $0x60] sm:$0xff]
    %v138 = vld [vmem:[#allocation8 + $0x68] sm:$0xff]
    %v139 = vld [vmem:[#allocation8 + $0x70] sm:$0xff]
    %v140 = vld [vmem:[#allocation8 + $0x78] sm:$0xff]
    %v141 = vld [vmem:[%s4] sm:$0x1]
    %v143 = vperm.slane %v141, 0
    %145 = vmatpush.msra.mxu0 %v140
    %146 = vmatpush.msra.mxu0 %v139
    %147 = vmatpush.msra.mxu0 %v138
    %148 = vmatpush.msra.mxu0 %v137
    %149 = vmatpush.msra.mxu0 %v136
    %150 = vmatpush.msra.mxu0 %v135
    %151 = vmatpush.msra.mxu0 %v134
    %152 = vmatpush.msra.mxu0 %v133
    %153 = vmatpush.msra.mxu0 %v132
    %154 = vmatpush.msra.mxu0 %v131
    %155 = vmatpush.msra.mxu0 %v130
    %156 = vmatpush.msra.mxu0 %v129
    %157 = vmatpush.msra.mxu0 %v128
    %158 = vmatpush.msra.mxu0 %v127
    %159 = vmatpush.msra.mxu0 %v126
    %160 = vmatpush.msra.mxu0 %v125
    %161 = vmatmul.f32.gmra.mxu0 %v123
    %v162 = vpop.f32.mrf.mxu0
    %v163 = vadd.f32 %v143, %v162
    %164 = vmatmul.f32.gmra.mxu0 %v124
    %v165 = vpop.f32.mrf.mxu0
    %v166 = vadd.f32 %v143, %v165
    %167 = vdwg.mxu0
    %v168 = vadd.f32 %v163, %v74
    %v169 = vadd.f32 %v166, %v75
    %170 = vadd.xlane.f32.xlu0 %v168
    %v171 = vpop.xlane.xlu0 %170
    %172 = vadd.xlane.f32.xlu0 %v169
    %v173 = vpop.xlane.xlu0 %172
    %v174 = vmul.f32 %v171, 0.03125
    %v175 = vmul.f32 %v173, 0.03125
    %v176 = vsub.f32 %v168, %v174
    %v177 = vsub.f32 %v169, %v175
    %v178 = vlaneseq
    %v179 = vand.u32 %v178, 127
    %vm180 = vcmp.lt.s32.totalorder %v179, 32
    %v181 = vsel %vm180, 1, 0
    %v182 = vcvt.s32.f32 %v181
    %v183 = vmul.f32 %v176, %v182
    %v184 = vmul.f32 %v177, %v182
    %v185 = vmul.f32 %v183, %v183
    %v186 = vmul.f32 %v184, %v184
    %187 = vadd.xlane.f32.xlu0 %v185
    %v188 = vpop.xlane.xlu0 %187
    %189 = vadd.xlane.f32.xlu0 %v186
    %v190 = vpop.xlane.xlu0 %189
    %v191 = vmul.f32 %v188, 0.03125
    %v192 = vmul.f32 %v190, 0.03125
    %v193 = vadd.f32 %v191, 1e-05
    %v194 = vadd.f32 %v192, 1e-05
    %v195 = vrsqrt.pop %v193
    %v196 = vmul.f32 %v195, %v193
    %v197 = vmul.f32 %v196, %v195
    %v198 = vmul.f32 0.5, %v197
    %v199 = vsub.f32 1.5, %v198
    %v200 = vmul.f32 %v195, %v199
    %vm201 = vweird.f32 %v193
    %vm202 = vweird.f32 %v195
    %vm203 = vmor %vm201, %vm202
    %v204 = vsel %vm203, %v195, %v200
    %v205 = vrsqrt.pop %v194
    %v206 = vmul.f32 %v205, %v194
    %v207 = vmul.f32 %v206, %v205
    %v208 = vmul.f32 0.5, %v207
    %v209 = vsub.f32 1.5, %v208
    %v210 = vmul.f32 %v205, %v209
    %vm211 = vweird.f32 %v194
    %vm212 = vweird.f32 %v205
    %vm213 = vmor %vm211, %vm212
    %v214 = vsel %vm213, %v205, %v210
    %v215 = vld [vmem:[%s5] sm:$0x1]
    %v217 = vperm.slane %v215, 0
    %v219 = vmul.f32 %v204, %v217
    %v220 = vmul.f32 %v214, %v217
    %v221 = vmul.f32 %v183, %v219
    %v222 = vmul.f32 %v184, %v220
    %v223 = vld [vmem:[%s6] sm:$0x1]
    %v225 = vperm.slane %v223, 0
    %v227 = vadd.f32 %v221, %v225
    %v228 = vadd.f32 %v222, %v225
    %229 = vst [vmem:[#allocation9] sm:$0xff] %v227
    %230 = vst [vmem:[#allocation9 + $0x8] sm:$0xff] %v228
    // Predicated region
    $region42: #{tpu_custom_call.1} parent=1 // pred_check
      _
    $region43: #{tpu_custom_call.1} parent=1 // pred_check_branch
      %232 = sbr.rel (0) target = $region45
    $region44: #{tpu_custom_call.1} parent=1 // pred_region
      %234 = vsyncadd [#allocation5], 0
      %s235 = sshll.u32 [#allocation9], 4
      %s236 = int_to_ptr.vmem [resolvable:$true] %s235
      %s237 = sshll.u32 %s7, 4
      %s238 = int_to_ptr.hbm [resolvable:$true] %s237
      %243 = dma.vmem_to_hbm [thread:$0]  %s236, 256, %s238, [#allocation5], 128, 128, 8
    $region45: #{tpu_custom_call.1} parent=1 // pred_fallthru
      _
    // Predicated region
    $region46: #{tpu_custom_call.1} parent=1 // pred_check
      _
    $region47: #{tpu_custom_call.1} parent=1 // pred_check_branch
      %245 = sbr.rel (0) target = $region49
    $region48: #{tpu_custom_call.1} parent=1 // pred_region
      %247 = dma.done [#allocation5], 256
    $region49: #{tpu_custom_call.1} parent=1 // pred_fallthru
      _
    %248 = vsyncpa [#allocation4], 1
    %249 = vsyncpa [#allocation7], 1
    %250 = vsyncpa [#allocation5], 1

// kernel: tpu_custom_call.1
$region0: #{tpu_custom_call.1}
  #allocation0 [shape = 'u32[]', space=smem, size = 0x4, offset = 0x4, fixed_abs, tag = 'smem constant byte address 0x4 - core index']
  #allocation1 [shape = 'u32[72,128]{1,0:T(1,128)}', space=vmem, size = 0x9000, scoped, tag = 'internal scratch']
  #allocation2 [shape = 'f32[16,128]{1,0:T(8,128)}', space=vmem, size = 0x2000, scoped, tag = 'scratch operand']
  %s0 = inlined_call_operand.hbm [shape: f32[16,128], index: 0, kind: input, shape index: {}]
  %s1 = inlined_call_operand.hbm [shape: f32[128,128], index: 1, kind: input, shape index: {}]
  %s2 = inlined_call_operand.vmem [shape: f32[1,128], index: 2, kind: input, shape index: {}]
  %s3 = inlined_call_operand.hbm [shape: f32[128,128], index: 3, kind: input, shape index: {}]
  %s4 = inlined_call_operand.vmem [shape: f32[1,128], index: 4, kind: input, shape index: {}]
  %s5 = inlined_call_operand.vmem [shape: f32[1,128], index: 5, kind: input, shape index: {}]
  %s6 = inlined_call_operand.vmem [shape: f32[1,128], index: 6, kind: input, shape index: {}]
  %s7 = inlined_call_operand.hbm [shape: f32[16,128], index: 7, kind: output, shape index: {}]
  %s8 = sld [smem:[#allocation0]]
  $region50: #{tpu_custom_call.1} parent=0
    _
  %s10 = ssub.s32 1, %s8
  %s11 = scalar_select 0, %s10, %s8
  $region1: #{tpu_custom_call.1} parent=0
    #allocation3 [shape = 'u8[8192]{0}', space=vmem, size = 0x2000, scoped, tag = 'input window, operand 0, single buffered']
    #allocation4 [shape = 's32[1]{0}', space=sflag, size = 0x4, scoped, tag = 'scoped memory for tpu_custom_call.1']
    #allocation5 [shape = 's32[1]{0}', space=sflag, size = 0x4, scoped, tag = 'scoped memory for tpu_custom_call.1']
    #allocation6 [shape = 'u8[65536]{0}', space=vmem, size = 0x10000, scoped, tag = 'input window, operand 1, single buffered']
    #allocation7 [shape = 's32[1]{0}', space=sflag, size = 0x4, scoped, tag = 'scoped memory for tpu_custom_call.1']
    #allocation8 [shape = 'u8[65536]{0}', space=vmem, size = 0x10000, scoped, tag = 'input window, operand 3, single buffered']
    #allocation9 [shape = 'u8[8192]{0}', space=vmem, size = 0x2000, scoped, tag = 'output window, operand 0, single buffered']
    %12 = vsyncpa [#allocation4], 0
    %13 = vsyncpa [#allocation7], 0
    %14 = vsyncpa [#allocation5], 0
    // Predicated region
    $region2: #{tpu_custom_call.1} parent=1 // pred_check
      _
    $region3: #{tpu_custom_call.1} parent=1 // pred_check_branch
      %16 = sbr.rel (0) target = $region5
    $region4: #{tpu_custom_call.1} parent=1 // pred_region
      %18 = vsyncadd [#allocation4], 0
      %s19 = sshll.u32 %s0, 4
      %s20 = int_to_ptr.hbm [resolvable:$true] %s19
      %s21 = sshll.u32 [#allocation3], 4
      %s22 = int_to_ptr.vmem [resolvable:$true] %s21
      %27 = dma.hbm_to_vmem [thread:$0]  %s20, 256, %s22, [#allocation4], 128, 128, 8
    $region5: #{tpu_custom_call.1} parent=1 // pred_fallthru
      _
    // Predicated region
    $region6: #{tpu_custom_call.1} parent=1 // pred_check
      _
    $region7: #{tpu_custom_call.1} parent=1 // pred_check_branch
      %29 = sbr.rel (0) target = $region9
    $region8: #{tpu_custom_call.1} parent=1 // pred_region
      %31 = vsyncadd [#allocation7], 0
      %s32 = sshll.u32 %s1, 4
      %s33 = int_to_ptr.hbm [resolvable:$true] %s32
      %s34 = sshll.u32 [#allocation6], 4
      %s35 = int_to_ptr.vmem [resolvable:$true] %s34
      %40 = dma.hbm_to_vmem [thread:$0]  %s33, 2048, %s35, [#allocation7], 128, 128, 8
    $region9: #{tpu_custom_call.1} parent=1 // pred_fallthru
      _
    // Predicated region
    $region10: #{tpu_custom_call.1} parent=1 // pred_check
      _
    $region11: #{tpu_custom_call.1} parent=1 // pred_check_branch
      %42 = sbr.rel (0) target = $region13
    $region12: #{tpu_custom_call.1} parent=1 // pred_region
      _
    $region13: #{tpu_custom_call.1} parent=1 // pred_fallthru
      _
    // Predicated region
    $region14: #{tpu_custom_call.1} parent=1 // pred_check
      _
    $region15: #{tpu_custom_call.1} parent=1 // pred_check_branch
      %44 = sbr.rel (0) target = $region17
    $region16: #{tpu_custom_call.1} parent=1 // pred_region
      %46 = vsyncadd [#allocation7], 0
      %s47 = sshll.u32 %s3, 4
      %s48 = int_to_ptr.hbm [resolvable:$true] %s47
      %s49 = sshll.u32 [#allocation8], 4
      %s50 = int_to_ptr.vmem [resolvable:$true] %s49
      %55 = dma.hbm_to_vmem [thread:$0]  %s48, 2048, %s50, [#allocation7], 128, 128, 8
    $region17: #{tpu_custom_call.1} parent=1 // pred_fallthru
      _
    // Predicated region
    $region18: #{tpu_custom_call.1} parent=1 // pred_check
      _
    $region19: #{tpu_custom_call.1} parent=1 // pred_check_branch
      %57 = sbr.rel (0) target = $region21
    $region20: #{tpu_custom_call.1} parent=1 // pred_region
      _
    $region21: #{tpu_custom_call.1} parent=1 // pred_fallthru
      _
    // Predicated region
    $region22: #{tpu_custom_call.1} parent=1 // pred_check
      _
    $region23: #{tpu_custom_call.1} parent=1 // pred_check_branch
      %59 = sbr.rel (0) target = $region25
    $region24: #{tpu_custom_call.1} parent=1 // pred_region
      _
    $region25: #{tpu_custom_call.1} parent=1 // pred_fallthru
      _
    // Predicated region
    $region26: #{tpu_custom_call.1} parent=1 // pred_check
      _
    $region27: #{tpu_custom_call.1} parent=1 // pred_check_branch
      %61 = sbr.rel (0) target = $region29
    $region28: #{tpu_custom_call.1} parent=1 // pred_region
      _
    $region29: #{tpu_custom_call.1} parent=1 // pred_fallthru
      _
    // Predicated region
    $region30: #{tpu_custom_call.1} parent=1 // pred_check
      _
    $region31: #{tpu_custom_call.1} parent=1 // pred_check_branch
      %63 = sbr.rel (0) target = $region33
    $region32: #{tpu_custom_call.1} parent=1 // pred_region
      %65 = dma.done [#allocation4], 256
    $region33: #{tpu_custom_call.1} parent=1 // pred_fallthru
      _
    // Predicated region
    $region34: #{tpu_custom_call.1} parent=1 // pred_check
      _
    $region35: #{tpu_custom_call.1} parent=1 // pred_check_branch
      %67 = sbr.rel (0) target = $region37
    $region36: #{tpu_custom_call.1} parent=1 // pred_region
      %69 = dma.done [#allocation7], 2048
    $region37: #{tpu_custom_call.1} parent=1 // pred_fallthru
      _
    // Predicated region
    $region38: #{tpu_custom_call.1} parent=1 // pred_check
      _
    $region39: #{tpu_custom_call.1} parent=1 // pred_check_branch
      %71 = sbr.rel (0) target = $region41
    $region40: #{tpu_custom_call.1} parent=1 // pred_region
      %73 = dma.done [#allocation7], 2048
    $region41: #{tpu_custom_call.1} parent=1 // pred_fallthru
      _
    %v74 = vld [vmem:[#allocation3] sm:$0xff]
    %v75 = vld [vmem:[#allocation3 + $0x8] sm:$0xff]
    %v76 = vld [vmem:[#allocation6] sm:$0xff]
    %v77 = vld [vmem:[#allocation6 + $0x8] sm:$0xff]
    %v78 = vld [vmem:[#allocation6 + $0x10] sm:$0xff]
    %v79 = vld [vmem:[#allocation6 + $0x18] sm:$0xff]
    %v80 = vld [vmem:[#allocation6 + $0x20] sm:$0xff]
    %v81 = vld [vmem:[#allocation6 + $0x28] sm:$0xff]
    %v82 = vld [vmem:[#allocation6 + $0x30] sm:$0xff]
    %v83 = vld [vmem:[#allocation6 + $0x38] sm:$0xff]
    %v84 = vld [vmem:[#allocation6 + $0x40] sm:$0xff]
    %v85 = vld [vmem:[#allocation6 + $0x48] sm:$0xff]
    %v86 = vld [vmem:[#allocation6 + $0x50] sm:$0xff]
    %v87 = vld [vmem:[#allocation6 + $0x58] sm:$0xff]
    %v88 = vld [vmem:[#allocation6 + $0x60] sm:$0xff]
    %v89 = vld [vmem:[#allocation6 + $0x68] sm:$0xff]
    %v90 = vld [vmem:[#allocation6 + $0x70] sm:$0xff]
    %v91 = vld [vmem:[#allocation6 + $0x78] sm:$0xff]
    %v92 = vld [vmem:[%s2] sm:$0x1]
    %v94 = vperm.slane %v92, 0
    %96 = vmatpush.msra.mxu0 %v91
    %97 = vmatpush.msra.mxu0 %v90
    %98 = vmatpush.msra.mxu0 %v89
    %99 = vmatpush.msra.mxu0 %v88
    %100 = vmatpush.msra.mxu0 %v87
    %101 = vmatpush.msra.mxu0 %v86
    %102 = vmatpush.msra.mxu0 %v85
    %103 = vmatpush.msra.mxu0 %v84
    %104 = vmatpush.msra.mxu0 %v83
    %105 = vmatpush.msra.mxu0 %v82
    %106 = vmatpush.msra.mxu0 %v81
    %107 = vmatpush.msra.mxu0 %v80
    %108 = vmatpush.msra.mxu0 %v79
    %109 = vmatpush.msra.mxu0 %v78
    %110 = vmatpush.msra.mxu0 %v77
    %111 = vmatpush.msra.mxu0 %v76
    %112 = vmatmul.f32.gmra.mxu0 %v74
    %v113 = vpop.f32.mrf.mxu0
    %v114 = vadd.f32 %v94, %v113
    %115 = vmatmul.f32.gmra.mxu0 %v75
    %v116 = vpop.f32.mrf.mxu0
    %v117 = vadd.f32 %v94, %v116
    %118 = vdwg.mxu0
    %v119 = vmax.f32 %v114, 0.0
    %v120 = vmax.f32 %v117, 0.0
    %121 = vst [vmem:[#allocation2] sm:$0xff] %v119
    %122 = vst [vmem:[#allocation2 + $0x8] sm:$0xff] %v120
    %v123 = vld [vmem:[#allocation2] sm:$0xff]
    %v124 = vld [vmem:[#allocation2 + $0x8] sm:$0xff]
    %v125 = vld [vmem:[#allocation8] sm:$0xff]
    %v126 = vld [vmem:[#allocation8 + $0x8] sm:$0xff]
    %v127 = vld [vmem:[#allocation8 + $0x10] sm:$0xff]
    %v128 = vld [vmem:[#allocation8 + $0x18] sm:$0xff]
    %v129 = vld [vmem:[#allocation8 + $0x20] sm:$0xff]
    %v130 = vld [vmem:[#allocation8 + $0x28] sm:$0xff]
    %v131 = vld [vmem:[#allocation8 + $0x30] sm:$0xff]
    %v132 = vld [vmem:[#allocation8 + $0x38] sm:$0xff]
    %v133 = vld [vmem:[#allocation8 + $0x40] sm:$0xff]
    %v134 = vld [vmem:[#allocation8 + $0x48] sm:$0xff]
    %v135 = vld [vmem:[#allocation8 + $0x50] sm:$0xff]
    %v136 = vld [vmem:[#allocation8 + $0x58] sm:$0xff]
    %v137 = vld [vmem:[#allocation8 + $0x60] sm:$0xff]
    %v138 = vld [vmem:[#allocation8 + $0x68] sm:$0xff]
    %v139 = vld [vmem:[#allocation8 + $0x70] sm:$0xff]
    %v140 = vld [vmem:[#allocation8 + $0x78] sm:$0xff]
    %v141 = vld [vmem:[%s4] sm:$0x1]
    %v143 = vperm.slane %v141, 0
    %145 = vmatpush.msra.mxu0 %v140
    %146 = vmatpush.msra.mxu0 %v139
    %147 = vmatpush.msra.mxu0 %v138
    %148 = vmatpush.msra.mxu0 %v137
    %149 = vmatpush.msra.mxu0 %v136
    %150 = vmatpush.msra.mxu0 %v135
    %151 = vmatpush.msra.mxu0 %v134
    %152 = vmatpush.msra.mxu0 %v133
    %153 = vmatpush.msra.mxu0 %v132
    %154 = vmatpush.msra.mxu0 %v131
    %155 = vmatpush.msra.mxu0 %v130
    %156 = vmatpush.msra.mxu0 %v129
    %157 = vmatpush.msra.mxu0 %v128
    %158 = vmatpush.msra.mxu0 %v127
    %159 = vmatpush.msra.mxu0 %v126
    %160 = vmatpush.msra.mxu0 %v125
    %161 = vmatmul.f32.gmra.mxu0 %v123
    %v162 = vpop.f32.mrf.mxu0
    %v163 = vadd.f32 %v143, %v162
    %164 = vmatmul.f32.gmra.mxu0 %v124
    %v165 = vpop.f32.mrf.mxu0
    %v166 = vadd.f32 %v143, %v165
    %167 = vdwg.mxu0
    %v168 = vadd.f32 %v163, %v74
    %v169 = vadd.f32 %v166, %v75
    %170 = vadd.xlane.f32.xlu0 %v168
    %v171 = vpop.xlane.xlu0 %170
    %172 = vadd.xlane.f32.xlu0 %v169
    %v173 = vpop.xlane.xlu0 %172
    %v174 = vmul.f32 %v171, 0.03125
    %v175 = vmul.f32 %v173, 0.03125
    %v176 = vsub.f32 %v168, %v174
    %v177 = vsub.f32 %v169, %v175
    %v178 = vlaneseq
    %v179 = vand.u32 %v178, 127
    %vm180 = vcmp.lt.s32.totalorder %v179, 32
    %v181 = vsel %vm180, 1, 0
    %v182 = vcvt.s32.f32 %v181
    %v183 = vmul.f32 %v176, %v182
    %v184 = vmul.f32 %v177, %v182
    %v185 = vmul.f32 %v183, %v183
    %v186 = vmul.f32 %v184, %v184
    %187 = vadd.xlane.f32.xlu0 %v185
    %v188 = vpop.xlane.xlu0 %187
    %189 = vadd.xlane.f32.xlu0 %v186
    %v190 = vpop.xlane.xlu0 %189
    %v191 = vmul.f32 %v188, 0.03125
    %v192 = vmul.f32 %v190, 0.03125
    %v193 = vadd.f32 %v191, 1e-05
    %v194 = vadd.f32 %v192, 1e-05
    %v195 = vrsqrt.pop %v193
    %v196 = vmul.f32 %v195, %v193
    %v197 = vmul.f32 %v196, %v195
    %v198 = vmul.f32 0.5, %v197
    %v199 = vsub.f32 1.5, %v198
    %v200 = vmul.f32 %v195, %v199
    %vm201 = vweird.f32 %v193
    %vm202 = vweird.f32 %v195
    %vm203 = vmor %vm201, %vm202
    %v204 = vsel %vm203, %v195, %v200
    %v205 = vrsqrt.pop %v194
    %v206 = vmul.f32 %v205, %v194
    %v207 = vmul.f32 %v206, %v205
    %v208 = vmul.f32 0.5, %v207
    %v209 = vsub.f32 1.5, %v208
    %v210 = vmul.f32 %v205, %v209
    %vm211 = vweird.f32 %v194
    %vm212 = vweird.f32 %v205
    %vm213 = vmor %vm211, %vm212
    %v214 = vsel %vm213, %v205, %v210
    %v215 = vld [vmem:[%s5] sm:$0x1]
    %v217 = vperm.slane %v215, 0
    %v219 = vmul.f32 %v204, %v217
    %v220 = vmul.f32 %v214, %v217
    %v221 = vmul.f32 %v183, %v219
    %v222 = vmul.f32 %v184, %v220
    %v223 = vld [vmem:[%s6] sm:$0x1]
    %v225 = vperm.slane %v223, 0
    %v227 = vadd.f32 %v221, %v225
    %v228 = vadd.f32 %v222, %v225
    %229 = vst [vmem:[#allocation9] sm:$0xff] %v227
    %230 = vst [vmem:[#allocation9 + $0x8] sm:$0xff] %v228
    // Predicated region
    $region42: #{tpu_custom_call.1} parent=1 // pred_check
      _
    $region43: #{tpu_custom_call.1} parent=1 // pred_check_branch
      %232 = sbr.rel (0) target = $region45
    $region44: #{tpu_custom_call.1} parent=1 // pred_region
      %234 = vsyncadd [#allocation5], 0
      %s235 = sshll.u32 [#allocation9], 4
      %s236 = int_to_ptr.vmem [resolvable:$true] %s235
      %s237 = sshll.u32 %s7, 4
      %s238 = int_to_ptr.hbm [resolvable:$true] %s237
      %243 = dma.vmem_to_hbm [thread:$0]  %s236, 256, %s238, [#allocation5], 128, 128, 8
    $region45: #{tpu_custom_call.1} parent=1 // pred_fallthru
      _
    // Predicated region
    $region46: #{tpu_custom_call.1} parent=1 // pred_check
      _
    $region47: #{tpu_custom_call.1} parent=1 // pred_check_branch
      %245 = sbr.rel (0) target = $region49
    $region48: #{tpu_custom_call.1} parent=1 // pred_region
      %247 = dma.done [#allocation5], 256
    $region49: #{tpu_custom_call.1} parent=1 // pred_fallthru
      _
    %248 = vsyncpa [#allocation4], 1
    %249 = vsyncpa [#allocation7], 1
    %250 = vsyncpa [#allocation5], 1

</llo_original>
